<compile_context>
chip_gen: v6e
topology: v6e:2x2x1
jax: 0.10.0
libtpu: 0.0.40
codegen_flags: <defaults>
</compile_context>

<pallas_src>
import functools

import jax
import jax.numpy as jnp
from jax.experimental import pallas as pl
from jax.experimental.pallas import tpu as pltpu

_F32_BYTES = 4
_LANE = 128
_SUBLANE = 8
_VMEM_LIMIT_BYTES = 48 * 1024 * 1024        # safe on v5e/v6e (128 MiB) and v7x (64 MiB)
_FUSED_VMEM_BUDGET_BYTES = 40 * 1024 * 1024  # budget for the H-resident fused path


def _round_up(n, m):
    return ((n + m - 1) // m) * m


# ---------------------------------------------------------------------------
# Fused multi-layer kernel: H resident in VMEM, intermediates never leave chip.
# ---------------------------------------------------------------------------
def _gnn_fused_kernel(h_ref, x_ref, *rest, n_layers, xw_first):
    w_refs = rest[:n_layers]
    o_ref = rest[n_layers]
    h = h_ref[...]
    y = x_ref[...]
    for l in range(n_layers):  # static unroll over layers
        w = w_refs[l][...]
        if xw_first[l]:
            # (x @ W) first: the N^2 matmul touches the narrower feature dim.
            t = jnp.dot(y, w, preferred_element_type=jnp.float32)
            y = jnp.dot(h, t, preferred_element_type=jnp.float32)
        else:
            t = jnp.dot(h, y, preferred_element_type=jnp.float32)
            y = jnp.dot(t, w, preferred_element_type=jnp.float32)
        if l < n_layers - 1:
            y = jnp.maximum(y, 0.0)  # ReLU rides free in the VPU slots
    o_ref[...] = y.astype(o_ref.dtype)


def _gnn_fused(H_pad, x_pad, weights_pad):
    n_pad = H_pad.shape[0]
    n_layers = len(weights_pad)
    fout_pad = weights_pad[-1].shape[1]
    xw_first = tuple(w.shape[1] < w.shape[0] for w in weights_pad)
    kernel = functools.partial(
        _gnn_fused_kernel, n_layers=n_layers, xw_first=xw_first
    )
    in_specs = [
        pl.BlockSpec(H_pad.shape, lambda: (0, 0)),
        pl.BlockSpec(x_pad.shape, lambda: (0, 0)),
    ]
    in_specs += [pl.BlockSpec(w.shape, lambda: (0, 0)) for w in weights_pad]
    return pl.pallas_call(
        kernel,
        out_shape=jax.ShapeDtypeStruct((n_pad, fout_pad), x_pad.dtype),
        in_specs=in_specs,
        out_specs=pl.BlockSpec((n_pad, fout_pad), lambda: (0, 0)),
        compiler_params=pltpu.CompilerParams(vmem_limit_bytes=_VMEM_LIMIT_BYTES),
    )(H_pad, x_pad, *weights_pad)


# ---------------------------------------------------------------------------
# Row-tiled per-layer kernel for large graphs (H streamed in row tiles).
# ---------------------------------------------------------------------------
def _gnn_layer_tiled_kernel(h_ref, x_ref, w_ref, o_ref, *, apply_relu, xw_first):
    if xw_first:
        t = jnp.dot(x_ref[...], w_ref[...], preferred_element_type=jnp.float32)
        y = jnp.dot(h_ref[...], t, preferred_element_type=jnp.float32)
    else:
        t = jnp.dot(h_ref[...], x_ref[...], preferred_element_type=jnp.float32)
        y = jnp.dot(t, w_ref[...], preferred_element_type=jnp.float32)
    if apply_relu:
        y = jnp.maximum(y, 0.0)
    o_ref[...] = y.astype(o_ref.dtype)


def _gnn_layer_tiled(H_pad, x_pad, W_pad, tm, apply_relu):
    n_pad = H_pad.shape[0]
    fin_pad, fout_pad = W_pad.shape
    xw_first = fout_pad < fin_pad
    kernel = functools.partial(
        _gnn_layer_tiled_kernel, apply_relu=apply_relu, xw_first=xw_first
    )
    return pl.pallas_call(
        kernel,
        out_shape=jax.ShapeDtypeStruct((n_pad, fout_pad), x_pad.dtype),
        grid=(n_pad // tm,),
        in_specs=[
            pl.BlockSpec((tm, n_pad), lambda i: (i, 0)),          # row tile of H
            pl.BlockSpec((n_pad, fin_pad), lambda i: (0, 0)),     # x resident
            pl.BlockSpec((fin_pad, fout_pad), lambda i: (0, 0)),  # W resident
        ],
        out_specs=pl.BlockSpec((tm, fout_pad), lambda i: (i, 0)),
        compiler_params=pltpu.CompilerParams(
            dimension_semantics=("parallel",),
            vmem_limit_bytes=_VMEM_LIMIT_BYTES,
        ),
    )(H_pad, x_pad, W_pad)


# ---------------------------------------------------------------------------
# Sizing heuristics
# ---------------------------------------------------------------------------
def _fused_vmem_estimate(n_pad, f_pads):
    h = n_pad * n_pad
    x = n_pad * f_pads[0]
    ws = sum(f_pads[l] * f_pads[l + 1] for l in range(len(f_pads) - 1))
    out = n_pad * f_pads[-1]
    inter = 2 * n_pad * max(f_pads)  # ping-pong layer intermediates
    return (2 * (h + x + ws + out) + inter) * _F32_BYTES


def _choose_row_tile(n, f_pads, budget_bytes):
    fmax = max(f_pads)
    n8 = _round_up(n, _SUBLANE)
    for tm in (512, 256, 128, 64, 32, 16, 8):
        if tm > n8:
            continue
        n_pad = _round_up(n, tm)
        # double-buffered H row tile + double-buffered resident x/W + out tile
        need = (
            2 * tm * n_pad
            + 2 * (n_pad * fmax + fmax * fmax)
            + 2 * tm * fmax
        ) * _F32_BYTES
        if need <= budget_bytes:
            return tm, n_pad
    return _SUBLANE, n8


# ---------------------------------------------------------------------------
# Module
# ---------------------------------------------------------------------------
class GNN:
    """JAX/Pallas port of the PyTorch GNN.

    F = [F0, ..., FL]; layer l computes H @ x @ W_l ([N, F_l] -> [N, F_{l+1}])
    with a ReLU between layers but not after the last one, matching
    nn.Sequential(GNNStep, nonlin, GNNStep, ..., GNNStep).
    """

    def __init__(self, H, F, key, arch_info=False,
                 fused_vmem_budget_bytes=_FUSED_VMEM_BUDGET_BYTES):
        H = jnp.asarray(H, jnp.float32)
        self.N = H.shape[1]
        self.F = list(F)
        self.f_pads = [_round_up(f, _LANE) for f in self.F]

        # Weight init identical to the PyTorch module:
        # U(-stdv, stdv), stdv = 1 / sqrt(Fin * Fout).
        self.weights = []
        for l in range(len(self.F) - 1):
            key, sub = jax.random.split(key)
            fin, fout = self.F[l], self.F[l + 1]
            stdv = 1.0 / float((fin * fout) ** 0.5)
            W = jax.random.uniform(
                sub, (fin, fout), dtype=jnp.float32, minval=-stdv, maxval=stdv
            )
            self.weights.append(W)

        # Path selection: fused (H resident, all layers in one pallas_call)
        # vs. row-tiled per-layer (scales to large graphs).
        n8 = _round_up(self.N, _SUBLANE)
        self.use_fused = (
            _fused_vmem_estimate(n8, self.f_pads) <= fused_vmem_budget_bytes
        )
        if self.use_fused:
            self.tm = None
            self.N_pad = n8
        else:
            self.tm, self.N_pad = _choose_row_tile(
                self.N, self.f_pads, _FUSED_VMEM_BUDGET_BYTES
            )

        # Zero-pad H and weights once (lane/sublane-aligned operands).
        self.H_pad = (
            jnp.zeros((self.N_pad, self.N_pad), jnp.float32)
            .at[: self.N, : self.N]
            .set(H)
        )
        self.weights_pad = []
        for l, W in enumerate(self.weights):
            fin, fout = W.shape
            Wp = jnp.zeros((self.f_pads[l], self.f_pads[l + 1]), jnp.float32)
            Wp = Wp.at[:fin, :fout].set(W)
            self.weights_pad.append(Wp)

        if arch_info:
            print("Architecture:")
            print("Graph N_nodes: {}".format(self.N))
            print("F: {}".format(self.F))
            print("Non lin: ReLU")

    def __call__(self, x):
        assert x.shape == (self.N, self.F[0])
        x = jnp.asarray(x, jnp.float32)
        x_pad = jnp.zeros((self.N_pad, self.f_pads[0]), jnp.float32)
        x_pad = x_pad.at[: self.N, : self.F[0]].set(x)

        if self.use_fused:
            y_pad = _gnn_fused(self.H_pad, x_pad, self.weights_pad)
        else:
            n_layers = len(self.weights_pad)
            y_pad = x_pad
            for l, Wp in enumerate(self.weights_pad):
                y_pad = _gnn_layer_tiled(
                    self.H_pad, y_pad, Wp, self.tm,
                    apply_relu=(l < n_layers - 1),
                )
        return y_pad[: self.N, : self.F[-1]]


# ---------------------------------------------------------------------------
# Reference & self-test
# ---------------------------------------------------------------------------
def _reference(H, x, weights):
    y = x
    n = len(weights)
    for l, W in enumerate(weights):
        y = H @ y @ W
        if l < n - 1:
            y = jnp.maximum(y, 0.0)
    return y


def _make_graph(key, n):
    a = jax.random.uniform(key, (n, n), dtype=jnp.float32)
    a = (a + a.T) * 0.5
    return a / jnp.sum(a, axis=1, keepdims=True)


if __name__ == "__main__":
    key = jax.random.PRNGKey(0)

    # --- Test 1: small graph -> fused multi-layer kernel path ---------------
    N1, F1 = 16, [4, 32, 8]
    key, kh1, kx1, kw1 = jax.random.split(key, 4)
    H1 = _make_graph(kh1, N1)
    x1 = jax.random.normal(kx1, (N1, F1[0]), dtype=jnp.float32)
    model1 = GNN(H1, F1, kw1, arch_info=False)
    assert model1.use_fused
    y1 = jax.block_until_ready(model1(x1))
    y1_ref = _reference(H1, x1, model1.weights)
    assert y1.shape == (N1, F1[-1])
    assert jnp.allclose(y1, y1_ref, atol=1e-5, rtol=1e-4), float(
        jnp.max(jnp.abs(y1 - y1_ref))
    )

    # --- Test 2: force the row-tiled per-layer path (multi-step parallel grid,
    #             exercises the (x @ W)-first association on the middle layer).
    N2, F2 = 48, [4, 200, 8]
    key, kh2, kx2, kw2 = jax.random.split(key, 4)
    H2 = _make_graph(kh2, N2)
    x2 = jax.random.normal(kx2, (N2, F2[0]), dtype=jnp.float32)
    model2 = GNN(H2, F2, kw2, arch_info=False, fused_vmem_budget_bytes=0)
    assert not model2.use_fused
    y2 = jax.block_until_ready(model2(x2))
    y2_ref = _reference(H2, x2, model2.weights)
    assert y2.shape == (N2, F2[-1])
    assert jnp.allclose(y2, y2_ref, atol=1e-5, rtol=1e-4), float(
        jnp.max(jnp.abs(y2 - y2_ref))
    )

    print("KERNEL_OK")
</pallas_src>

<mosaic_0001>
module attributes {stable_mosaic.version = 11 : i64} {
  func.func @_gnn_fused_kernel(%arg0: memref<16x16xf32, #tpu.memory_space<vmem>>, %arg1: memref<16x128xf32, #tpu.memory_space<vmem>>, %arg2: memref<128x128xf32, #tpu.memory_space<vmem>>, %arg3: memref<128x128xf32, #tpu.memory_space<vmem>>, %arg4: memref<16x128xf32, #tpu.memory_space<vmem>>) attributes {dimension_semantics = [], scalar_prefetch = 0 : i64, scratch_operands = 0 : i64, tpu.core_type = #tpu.core_type<tc>} {
    %c0 = arith.constant 0 : index
    %c0_0 = arith.constant 0 : index
    %0 = vector.load %arg0[%c0, %c0_0] : memref<16x16xf32, #tpu.memory_space<vmem>>, vector<16x16xf32>
    %c0_1 = arith.constant 0 : index
    %c0_2 = arith.constant 0 : index
    %1 = vector.load %arg1[%c0_1, %c0_2] : memref<16x128xf32, #tpu.memory_space<vmem>>, vector<16x128xf32>
    %c0_3 = arith.constant 0 : index
    %c0_4 = arith.constant 0 : index
    %2 = vector.load %arg2[%c0_3, %c0_4] : memref<128x128xf32, #tpu.memory_space<vmem>>, vector<128x128xf32>
    %cst = arith.constant dense<0.000000e+00> : vector<16x128xf32>
    %3 = tpu.matmul %0, %1, %cst {dimension_numbers = #tpu.dot_dimension_numbers<[1], [0], [0], [1], [0, 0, 1, 1], [], []>} : vector<16x16xf32>, vector<16x128xf32>, vector<16x128xf32> -> vector<16x128xf32>
    %cst_5 = arith.constant dense<0.000000e+00> : vector<16x128xf32>
    %4 = tpu.matmul %3, %2, %cst_5 {dimension_numbers = #tpu.dot_dimension_numbers<[1], [0], [0], [1], [0, 0, 1, 1], [], []>} : vector<16x128xf32>, vector<128x128xf32>, vector<16x128xf32> -> vector<16x128xf32>
    %cst_6 = arith.constant 0.000000e+00 : f32
    %5 = vector.broadcast %cst_6 : f32 to vector<16x128xf32>
    %6 = arith.maximumf %4, %5 : vector<16x128xf32>
    %c0_7 = arith.constant 0 : index
    %c0_8 = arith.constant 0 : index
    %7 = vector.load %arg3[%c0_7, %c0_8] : memref<128x128xf32, #tpu.memory_space<vmem>>, vector<128x128xf32>
    %cst_9 = arith.constant dense<0.000000e+00> : vector<16x128xf32>
    %8 = tpu.matmul %0, %6, %cst_9 {dimension_numbers = #tpu.dot_dimension_numbers<[1], [0], [0], [1], [0, 0, 1, 1], [], []>} : vector<16x16xf32>, vector<16x128xf32>, vector<16x128xf32> -> vector<16x128xf32>
    %cst_10 = arith.constant dense<0.000000e+00> : vector<16x128xf32>
    %9 = tpu.matmul %8, %7, %cst_10 {dimension_numbers = #tpu.dot_dimension_numbers<[1], [0], [0], [1], [0, 0, 1, 1], [], []>} : vector<16x128xf32>, vector<128x128xf32>, vector<16x128xf32> -> vector<16x128xf32>
    %c0_11 = arith.constant 0 : index
    %c0_12 = arith.constant 0 : index
    %10 = vector.load %arg4[%c0_11, %c0_12] : memref<16x128xf32, #tpu.memory_space<vmem>>, vector<16x128xf32>
    tpu.vector_store %arg4[%c0_11, %c0_12], %9 {strides = array<i32>} : memref<16x128xf32, #tpu.memory_space<vmem>>, vector<16x128xf32>,
    return
  }
}

</mosaic_0001>

<llo_original>
// kernel: tpu_custom_call.1
$region0: #{tpu_custom_call.1}
  #allocation0 [shape = 'u32[]', space=smem, size = 0x4, offset = 0x4, fixed_abs, tag = 'smem constant byte address 0x4 - core index']
  #allocation1 [shape = 'u32[144,128]{1,0:T(1,128)}', space=vmem, size = 0x12000, scoped, tag = 'internal scratch']
  %s0 = inlined_call_operand.hbm [shape: f32[16,16], index: 0, kind: input, shape index: {}]
  %s1 = inlined_call_operand.hbm [shape: f32[16,128], index: 1, kind: input, shape index: {}]
  %s2 = inlined_call_operand.hbm [shape: f32[128,128], index: 2, kind: input, shape index: {}]
  %s3 = inlined_call_operand.hbm [shape: f32[128,128], index: 3, kind: input, shape index: {}]
  %s4 = inlined_call_operand.hbm [shape: f32[16,128], index: 4, kind: output, shape index: {}]
  %s5 = sld [smem:[#allocation0]]
  $region42: #{tpu_custom_call.1} parent=0
    _
  %s7 = ssub.s32 1, %s5
  %s8 = scalar_select 0, %s7, %s5
  $region1: #{tpu_custom_call.1} parent=0
    #allocation2 [shape = 'u8[8192]{0}', space=vmem, size = 0x2000, scoped, tag = 'input window, operand 0, single buffered']
    #allocation3 [shape = 's32[1]{0}', space=sflag, size = 0x4, scoped, tag = 'scoped memory for tpu_custom_call.1']
    #allocation4 [shape = 's32[1]{0}', space=sflag, size = 0x4, scoped, tag = 'scoped memory for tpu_custom_call.1']
    #allocation5 [shape = 'u8[8192]{0}', space=vmem, size = 0x2000, scoped, tag = 'input window, operand 1, single buffered']
    #allocation6 [shape = 's32[1]{0}', space=sflag, size = 0x4, scoped, tag = 'scoped memory for tpu_custom_call.1']
    #allocation7 [shape = 'u8[65536]{0}', space=vmem, size = 0x10000, scoped, tag = 'input window, operand 2, single buffered']
    #allocation8 [shape = 'u8[65536]{0}', space=vmem, size = 0x10000, scoped, tag = 'input window, operand 3, single buffered']
    #allocation9 [shape = 's32[1]{0}', space=sflag, size = 0x4, scoped, tag = 'scoped memory for tpu_custom_call.1']
    #allocation10 [shape = 'u8[8192]{0}', space=vmem, size = 0x2000, scoped, tag = 'output window, operand 0, single buffered']
    %9 = vsyncpa [#allocation3], 0
    %10 = vsyncpa [#allocation6], 0
    %11 = vsyncpa [#allocation9], 0
    %12 = vsyncpa [#allocation4], 0
    // Predicated region
    $region2: #{tpu_custom_call.1} parent=1 // pred_check
      _
    $region3: #{tpu_custom_call.1} parent=1 // pred_check_branch
      %14 = sbr.rel (0) target = $region5
    $region4: #{tpu_custom_call.1} parent=1 // pred_region
      %s16 = ssub.s32 256, 256
      %17 = vsyncadd [#allocation3], %s16
      %s18 = sshll.u32 [#allocation2], 4
      %s19 = int_to_ptr.vmem [resolvable:$true] %s18
      %24 = dma.hbm_to_vmem [thread:$0]  %s0, 256, %s19, [#allocation3], 128, 128, 8
    $region5: #{tpu_custom_call.1} parent=1 // pred_fallthru
      _
    // Predicated region
    $region6: #{tpu_custom_call.1} parent=1 // pred_check
      _
    $region7: #{tpu_custom_call.1} parent=1 // pred_check_branch
      %26 = sbr.rel (0) target = $region9
    $region8: #{tpu_custom_call.1} parent=1 // pred_region
      %s28 = ssub.s32 256, 256
      %29 = vsyncadd [#allocation6], %s28
      %s30 = sshll.u32 [#allocation5], 4
      %s31 = int_to_ptr.vmem [resolvable:$true] %s30
      %36 = dma.hbm_to_vmem [thread:$0]  %s1, 256, %s31, [#allocation6], 128, 128, 8
    $region9: #{tpu_custom_call.1} parent=1 // pred_fallthru
      _
    // Predicated region
    $region10: #{tpu_custom_call.1} parent=1 // pred_check
      _
    $region11: #{tpu_custom_call.1} parent=1 // pred_check_branch
      %38 = sbr.rel (0) target = $region13
    $region12: #{tpu_custom_call.1} parent=1 // pred_region
      %s40 = ssub.s32 2048, 2048
      %41 = vsyncadd [#allocation6], %s40
      %s42 = sshll.u32 [#allocation7], 4
      %s43 = int_to_ptr.vmem [resolvable:$true] %s42
      %48 = dma.hbm_to_vmem [thread:$0]  %s2, 2048, %s43, [#allocation6], 128, 128, 8
    $region13: #{tpu_custom_call.1} parent=1 // pred_fallthru
      _
    // Predicated region
    $region14: #{tpu_custom_call.1} parent=1 // pred_check
      _
    $region15: #{tpu_custom_call.1} parent=1 // pred_check_branch
      %50 = sbr.rel (0) target = $region17
    $region16: #{tpu_custom_call.1} parent=1 // pred_region
      %s52 = ssub.s32 2048, 2048
      %53 = vsyncadd [#allocation9], %s52
      %s54 = sshll.u32 [#allocation8], 4
      %s55 = int_to_ptr.vmem [resolvable:$true] %s54
      %60 = dma.hbm_to_vmem [thread:$0]  %s3, 2048, %s55, [#allocation9], 128, 128, 8
    $region17: #{tpu_custom_call.1} parent=1 // pred_fallthru
      _
    // Predicated region
    $region18: #{tpu_custom_call.1} parent=1 // pred_check
      _
    $region19: #{tpu_custom_call.1} parent=1 // pred_check_branch
      %62 = sbr.rel (0) target = $region21
    $region20: #{tpu_custom_call.1} parent=1 // pred_region
      %63 = dma.done [#allocation3], 256
    $region21: #{tpu_custom_call.1} parent=1 // pred_fallthru
      _
    // Predicated region
    $region22: #{tpu_custom_call.1} parent=1 // pred_check
      _
    $region23: #{tpu_custom_call.1} parent=1 // pred_check_branch
      %65 = sbr.rel (0) target = $region25
    $region24: #{tpu_custom_call.1} parent=1 // pred_region
      %66 = dma.done [#allocation6], 256
    $region25: #{tpu_custom_call.1} parent=1 // pred_fallthru
      _
    // Predicated region
    $region26: #{tpu_custom_call.1} parent=1 // pred_check
      _
    $region27: #{tpu_custom_call.1} parent=1 // pred_check_branch
      %68 = sbr.rel (0) target = $region29
    $region28: #{tpu_custom_call.1} parent=1 // pred_region
      %69 = dma.done [#allocation6], 2048
    $region29: #{tpu_custom_call.1} parent=1 // pred_fallthru
      _
    // Predicated region
    $region30: #{tpu_custom_call.1} parent=1 // pred_check
      _
    $region31: #{tpu_custom_call.1} parent=1 // pred_check_branch
      %71 = sbr.rel (0) target = $region33
    $region32: #{tpu_custom_call.1} parent=1 // pred_region
      %72 = dma.done [#allocation9], 2048
    $region33: #{tpu_custom_call.1} parent=1 // pred_fallthru
      _
    %v73 = vld [vmem:[#allocation2] sm:$0xff]
    %v74 = vld [vmem:[#allocation2 + $0x8] sm:$0xff]
    %v75 = vld [vmem:[#allocation5] sm:$0xff]
    %v76 = vld [vmem:[#allocation5 + $0x8] sm:$0xff]
    %v77 = vld [vmem:[#allocation7] sm:$0xff]
    %v78 = vld [vmem:[#allocation7 + $0x8] sm:$0xff]
    %v79 = vld [vmem:[#allocation7 + $0x10] sm:$0xff]
    %v80 = vld [vmem:[#allocation7 + $0x18] sm:$0xff]
    %v81 = vld [vmem:[#allocation7 + $0x20] sm:$0xff]
    %v82 = vld [vmem:[#allocation7 + $0x28] sm:$0xff]
    %v83 = vld [vmem:[#allocation7 + $0x30] sm:$0xff]
    %v84 = vld [vmem:[#allocation7 + $0x38] sm:$0xff]
    %v85 = vld [vmem:[#allocation7 + $0x40] sm:$0xff]
    %v86 = vld [vmem:[#allocation7 + $0x48] sm:$0xff]
    %v87 = vld [vmem:[#allocation7 + $0x50] sm:$0xff]
    %v88 = vld [vmem:[#allocation7 + $0x58] sm:$0xff]
    %v89 = vld [vmem:[#allocation7 + $0x60] sm:$0xff]
    %v90 = vld [vmem:[#allocation7 + $0x68] sm:$0xff]
    %v91 = vld [vmem:[#allocation7 + $0x70] sm:$0xff]
    %v92 = vld [vmem:[#allocation7 + $0x78] sm:$0xff]
    %vm93 = vcmask 130048
    %v95 = vsel %vm93, %v73, 0
    %v98 = vsel %vm93, %v74, 0
    %100 = vmatprep.subr.mxu0 0.0
    %101 = vmatpush1.msra.mxu0 0.0
    %102 = vmatprep.subr.mxu0 0.0
    %103 = vmatpush1.msra.mxu0 0.0
    %104 = vmatprep.subr.mxu0 0.0
    %105 = vmatpush1.msra.mxu0 0.0
    %106 = vmatprep.subr.mxu0 0.0
    %107 = vmatpush1.msra.mxu0 0.0
    %108 = vmatprep.subr.mxu0 0.0
    %109 = vmatpush1.msra.mxu0 0.0
    %110 = vmatprep.subr.mxu0 0.0
    %111 = vmatpush1.msra.mxu0 0.0
    %112 = vmatprep.subr.mxu0 0.0
    %113 = vmatpush1.msra.mxu0 0.0
    %114 = vmatprep.subr.mxu0 0.0
    %115 = vmatpush1.msra.mxu0 0.0
    %116 = vmatprep.subr.mxu0 0.0
    %117 = vmatpush1.msra.mxu0 0.0
    %118 = vmatprep.subr.mxu0 0.0
    %119 = vmatpush1.msra.mxu0 0.0
    %120 = vmatprep.subr.mxu0 0.0
    %121 = vmatpush1.msra.mxu0 0.0
    %122 = vmatprep.subr.mxu0 0.0
    %123 = vmatpush1.msra.mxu0 0.0
    %124 = vmatprep.subr.mxu0 0.0
    %125 = vmatpush1.msra.mxu0 0.0
    %126 = vmatprep.subr.mxu0 0.0
    %127 = vmatpush1.msra.mxu0 0.0
    %128 = vmatprep.subr.mxu0 0.0
    %129 = vmatpush1.msra.mxu0 %v76
    %130 = vmatprep.subr.mxu0 0.0
    %131 = vmatpush1.msra.mxu0 %v75
    %132 = vmatprep.subr.mxu0 0.0
    %133 = vmatpush2.msra.mxu0 0.0
    %134 = vmatprep.subr.mxu0 0.0
    %135 = vmatpush2.msra.mxu0 0.0
    %136 = vmatprep.subr.mxu0 0.0
    %137 = vmatpush2.msra.mxu0 0.0
    %138 = vmatprep.subr.mxu0 0.0
    %139 = vmatpush2.msra.mxu0 0.0
    %140 = vmatprep.subr.mxu0 0.0
    %141 = vmatpush2.msra.mxu0 0.0
    %142 = vmatprep.subr.mxu0 0.0
    %143 = vmatpush2.msra.mxu0 0.0
    %144 = vmatprep.subr.mxu0 0.0
    %145 = vmatpush2.msra.mxu0 0.0
    %146 = vmatprep.subr.mxu0 0.0
    %147 = vmatpush2.msra.mxu0 0.0
    %148 = vmatprep.subr.mxu0 0.0
    %149 = vmatpush2.msra.mxu0 0.0
    %150 = vmatprep.subr.mxu0 0.0
    %151 = vmatpush2.msra.mxu0 0.0
    %152 = vmatprep.subr.mxu0 0.0
    %153 = vmatpush2.msra.mxu0 0.0
    %154 = vmatprep.subr.mxu0 0.0
    %155 = vmatpush2.msra.mxu0 0.0
    %156 = vmatprep.subr.mxu0 0.0
    %157 = vmatpush2.msra.mxu0 0.0
    %158 = vmatprep.subr.mxu0 0.0
    %159 = vmatpush2.msra.mxu0 0.0
    %160 = vmatprep.subr.mxu0 0.0
    %161 = vmatpush2.msra.mxu0 0.0
    %162 = vmatprep.subr.mxu0 0.0
    %163 = vmatpush2.msra.mxu0 0.0
    %164 = vmatprep.mubr.f32.mxu0 0.0
    %165 = vmatmul.mubr.f32.gmra.mxu0 %v95
    %v166 = vpop.f32.mrf.mxu0
    %v167 = vadd.f32 0.0, %v166
    %v168 = vpop.f32.mrf.mxu0
    %169 = vmatprep.mubr.f32.mxu0 0.0
    %170 = vmatmul.mubr.f32.gmra.mxu0 %v98
    %v171 = vpop.f32.mrf.mxu0
    %v172 = vadd.f32 0.0, %v171
    %v173 = vpop.f32.mrf.mxu0
    %174 = vdwg.mxu0
    %175 = vmatprep.subr.mxu0 0.0
    %176 = vmatpush1.msra.mxu0 %v92
    %177 = vmatprep.subr.mxu0 0.0
    %178 = vmatpush1.msra.mxu0 %v91
    %179 = vmatprep.subr.mxu0 0.0
    %180 = vmatpush1.msra.mxu0 %v90
    %181 = vmatprep.subr.mxu0 0.0
    %182 = vmatpush1.msra.mxu0 %v89
    %183 = vmatprep.subr.mxu0 0.0
    %184 = vmatpush1.msra.mxu0 %v88
    %185 = vmatprep.subr.mxu0 0.0
    %186 = vmatpush1.msra.mxu0 %v87
    %187 = vmatprep.subr.mxu0 0.0
    %188 = vmatpush1.msra.mxu0 %v86
    %189 = vmatprep.subr.mxu0 0.0
    %190 = vmatpush1.msra.mxu0 %v85
    %191 = vmatprep.subr.mxu0 0.0
    %192 = vmatpush1.msra.mxu0 %v84
    %193 = vmatprep.subr.mxu0 0.0
    %194 = vmatpush1.msra.mxu0 %v83
    %195 = vmatprep.subr.mxu0 0.0
    %196 = vmatpush1.msra.mxu0 %v82
    %197 = vmatprep.subr.mxu0 0.0
    %198 = vmatpush1.msra.mxu0 %v81
    %199 = vmatprep.subr.mxu0 0.0
    %200 = vmatpush1.msra.mxu0 %v80
    %201 = vmatprep.subr.mxu0 0.0
    %202 = vmatpush1.msra.mxu0 %v79
    %203 = vmatprep.subr.mxu0 0.0
    %204 = vmatpush1.msra.mxu0 %v78
    %205 = vmatprep.subr.mxu0 0.0
    %206 = vmatpush1.msra.mxu0 %v77
    %207 = vmatprep.subr.mxu0 0.0
    %208 = vmatpush2.msra.mxu0 0.0
    %209 = vmatprep.subr.mxu0 0.0
    %210 = vmatpush2.msra.mxu0 0.0
    %211 = vmatprep.subr.mxu0 0.0
    %212 = vmatpush2.msra.mxu0 0.0
    %213 = vmatprep.subr.mxu0 0.0
    %214 = vmatpush2.msra.mxu0 0.0
    %215 = vmatprep.subr.mxu0 0.0
    %216 = vmatpush2.msra.mxu0 0.0
    %217 = vmatprep.subr.mxu0 0.0
    %218 = vmatpush2.msra.mxu0 0.0
    %219 = vmatprep.subr.mxu0 0.0
    %220 = vmatpush2.msra.mxu0 0.0
    %221 = vmatprep.subr.mxu0 0.0
    %222 = vmatpush2.msra.mxu0 0.0
    %223 = vmatprep.subr.mxu0 0.0
    %224 = vmatpush2.msra.mxu0 0.0
    %225 = vmatprep.subr.mxu0 0.0
    %226 = vmatpush2.msra.mxu0 0.0
    %227 = vmatprep.subr.mxu0 0.0
    %228 = vmatpush2.msra.mxu0 0.0
    %229 = vmatprep.subr.mxu0 0.0
    %230 = vmatpush2.msra.mxu0 0.0
    %231 = vmatprep.subr.mxu0 0.0
    %232 = vmatpush2.msra.mxu0 0.0
    %233 = vmatprep.subr.mxu0 0.0
    %234 = vmatpush2.msra.mxu0 0.0
    %235 = vmatprep.subr.mxu0 0.0
    %236 = vmatpush2.msra.mxu0 0.0
    %237 = vmatprep.subr.mxu0 0.0
    %238 = vmatpush2.msra.mxu0 0.0
    %239 = vmatprep.mubr.f32.mxu0 0.0
    %240 = vmatmul.mubr.f32.gmra.mxu0 %v167
    %v241 = vpop.f32.mrf.mxu0
    %v242 = vadd.f32 0.0, %v241
    %v243 = vpop.f32.mrf.mxu0
    %244 = vmatprep.mubr.f32.mxu0 0.0
    %245 = vmatmul.mubr.f32.gmra.mxu0 %v172
    %v246 = vpop.f32.mrf.mxu0
    %v247 = vadd.f32 0.0, %v246
    %v248 = vpop.f32.mrf.mxu0
    %249 = vdwg.mxu0
    %v250 = vmax.f32 %v242, 0.0
    %v251 = vmax.f32 %v247, 0.0
    %v252 = vld [vmem:[#allocation8] sm:$0xff]
    %v253 = vld [vmem:[#allocation8 + $0x8] sm:$0xff]
    %v254 = vld [vmem:[#allocation8 + $0x10] sm:$0xff]
    %v255 = vld [vmem:[#allocation8 + $0x18] sm:$0xff]
    %v256 = vld [vmem:[#allocation8 + $0x20] sm:$0xff]
    %v257 = vld [vmem:[#allocation8 + $0x28] sm:$0xff]
    %v258 = vld [vmem:[#allocation8 + $0x30] sm:$0xff]
    %v259 = vld [vmem:[#allocation8 + $0x38] sm:$0xff]
    %v260 = vld [vmem:[#allocation8 + $0x40] sm:$0xff]
    %v261 = vld [vmem:[#allocation8 + $0x48] sm:$0xff]
    %v262 = vld [vmem:[#allocation8 + $0x50] sm:$0xff]
    %v263 = vld [vmem:[#allocation8 + $0x58] sm:$0xff]
    %v264 = vld [vmem:[#allocation8 + $0x60] sm:$0xff]
    %v265 = vld [vmem:[#allocation8 + $0x68] sm:$0xff]
    %v266 = vld [vmem:[#allocation8 + $0x70] sm:$0xff]
    %v267 = vld [vmem:[#allocation8 + $0x78] sm:$0xff]
    %268 = vmatprep.subr.mxu0 0.0
    %269 = vmatpush1.msra.mxu0 0.0
    %270 = vmatprep.subr.mxu0 0.0
    %271 = vmatpush1.msra.mxu0 0.0
    %272 = vmatprep.subr.mxu0 0.0
    %273 = vmatpush1.msra.mxu0 0.0
    %274 = vmatprep.subr.mxu0 0.0
    %275 = vmatpush1.msra.mxu0 0.0
    %276 = vmatprep.subr.mxu0 0.0
    %277 = vmatpush1.msra.mxu0 0.0
    %278 = vmatprep.subr.mxu0 0.0
    %279 = vmatpush1.msra.mxu0 0.0
    %280 = vmatprep.subr.mxu0 0.0
    %281 = vmatpush1.msra.mxu0 0.0
    %282 = vmatprep.subr.mxu0 0.0
    %283 = vmatpush1.msra.mxu0 0.0
    %284 = vmatprep.subr.mxu0 0.0
    %285 = vmatpush1.msra.mxu0 0.0
    %286 = vmatprep.subr.mxu0 0.0
    %287 = vmatpush1.msra.mxu0 0.0
    %288 = vmatprep.subr.mxu0 0.0
    %289 = vmatpush1.msra.mxu0 0.0
    %290 = vmatprep.subr.mxu0 0.0
    %291 = vmatpush1.msra.mxu0 0.0
    %292 = vmatprep.subr.mxu0 0.0
    %293 = vmatpush1.msra.mxu0 0.0
    %294 = vmatprep.subr.mxu0 0.0
    %295 = vmatpush1.msra.mxu0 0.0
    %296 = vmatprep.subr.mxu0 0.0
    %297 = vmatpush1.msra.mxu0 %v251
    %298 = vmatprep.subr.mxu0 0.0
    %299 = vmatpush1.msra.mxu0 %v250
    %300 = vmatprep.subr.mxu0 0.0
    %301 = vmatpush2.msra.mxu0 0.0
    %302 = vmatprep.subr.mxu0 0.0
    %303 = vmatpush2.msra.mxu0 0.0
    %304 = vmatprep.subr.mxu0 0.0
    %305 = vmatpush2.msra.mxu0 0.0
    %306 = vmatprep.subr.mxu0 0.0
    %307 = vmatpush2.msra.mxu0 0.0
    %308 = vmatprep.subr.mxu0 0.0
    %309 = vmatpush2.msra.mxu0 0.0
    %310 = vmatprep.subr.mxu0 0.0
    %311 = vmatpush2.msra.mxu0 0.0
    %312 = vmatprep.subr.mxu0 0.0
    %313 = vmatpush2.msra.mxu0 0.0
    %314 = vmatprep.subr.mxu0 0.0
    %315 = vmatpush2.msra.mxu0 0.0
    %316 = vmatprep.subr.mxu0 0.0
    %317 = vmatpush2.msra.mxu0 0.0
    %318 = vmatprep.subr.mxu0 0.0
    %319 = vmatpush2.msra.mxu0 0.0
    %320 = vmatprep.subr.mxu0 0.0
    %321 = vmatpush2.msra.mxu0 0.0
    %322 = vmatprep.subr.mxu0 0.0
    %323 = vmatpush2.msra.mxu0 0.0
    %324 = vmatprep.subr.mxu0 0.0
    %325 = vmatpush2.msra.mxu0 0.0
    %326 = vmatprep.subr.mxu0 0.0
    %327 = vmatpush2.msra.mxu0 0.0
    %328 = vmatprep.subr.mxu0 0.0
    %329 = vmatpush2.msra.mxu0 0.0
    %330 = vmatprep.subr.mxu0 0.0
    %331 = vmatpush2.msra.mxu0 0.0
    %332 = vmatprep.mubr.f32.mxu0 0.0
    %333 = vmatmul.mubr.f32.gmra.mxu0 %v95
    %v334 = vpop.f32.mrf.mxu0
    %v335 = vadd.f32 0.0, %v334
    %v336 = vpop.f32.mrf.mxu0
    %337 = vmatprep.mubr.f32.mxu0 0.0
    %338 = vmatmul.mubr.f32.gmra.mxu0 %v98
    %v339 = vpop.f32.mrf.mxu0
    %v340 = vadd.f32 0.0, %v339
    %v341 = vpop.f32.mrf.mxu0
    %342 = vdwg.mxu0
    %343 = vmatprep.subr.mxu0 0.0
    %344 = vmatpush1.msra.mxu0 %v267
    %345 = vmatprep.subr.mxu0 0.0
    %346 = vmatpush1.msra.mxu0 %v266
    %347 = vmatprep.subr.mxu0 0.0
    %348 = vmatpush1.msra.mxu0 %v265
    %349 = vmatprep.subr.mxu0 0.0
    %350 = vmatpush1.msra.mxu0 %v264
    %351 = vmatprep.subr.mxu0 0.0
    %352 = vmatpush1.msra.mxu0 %v263
    %353 = vmatprep.subr.mxu0 0.0
    %354 = vmatpush1.msra.mxu0 %v262
    %355 = vmatprep.subr.mxu0 0.0
    %356 = vmatpush1.msra.mxu0 %v261
    %357 = vmatprep.subr.mxu0 0.0
    %358 = vmatpush1.msra.mxu0 %v260
    %359 = vmatprep.subr.mxu0 0.0
    %360 = vmatpush1.msra.mxu0 %v259
    %361 = vmatprep.subr.mxu0 0.0
    %362 = vmatpush1.msra.mxu0 %v258
    %363 = vmatprep.subr.mxu0 0.0
    %364 = vmatpush1.msra.mxu0 %v257
    %365 = vmatprep.subr.mxu0 0.0
    %366 = vmatpush1.msra.mxu0 %v256
    %367 = vmatprep.subr.mxu0 0.0
    %368 = vmatpush1.msra.mxu0 %v255
    %369 = vmatprep.subr.mxu0 0.0
    %370 = vmatpush1.msra.mxu0 %v254
    %371 = vmatprep.subr.mxu0 0.0
    %372 = vmatpush1.msra.mxu0 %v253
    %373 = vmatprep.subr.mxu0 0.0
    %374 = vmatpush1.msra.mxu0 %v252
    %375 = vmatprep.subr.mxu0 0.0
    %376 = vmatpush2.msra.mxu0 0.0
    %377 = vmatprep.subr.mxu0 0.0
    %378 = vmatpush2.msra.mxu0 0.0
    %379 = vmatprep.subr.mxu0 0.0
    %380 = vmatpush2.msra.mxu0 0.0
    %381 = vmatprep.subr.mxu0 0.0
    %382 = vmatpush2.msra.mxu0 0.0
    %383 = vmatprep.subr.mxu0 0.0
    %384 = vmatpush2.msra.mxu0 0.0
    %385 = vmatprep.subr.mxu0 0.0
    %386 = vmatpush2.msra.mxu0 0.0
    %387 = vmatprep.subr.mxu0 0.0
    %388 = vmatpush2.msra.mxu0 0.0
    %389 = vmatprep.subr.mxu0 0.0
    %390 = vmatpush2.msra.mxu0 0.0
    %391 = vmatprep.subr.mxu0 0.0
    %392 = vmatpush2.msra.mxu0 0.0
    %393 = vmatprep.subr.mxu0 0.0
    %394 = vmatpush2.msra.mxu0 0.0
    %395 = vmatprep.subr.mxu0 0.0
    %396 = vmatpush2.msra.mxu0 0.0
    %397 = vmatprep.subr.mxu0 0.0
    %398 = vmatpush2.msra.mxu0 0.0
    %399 = vmatprep.subr.mxu0 0.0
    %400 = vmatpush2.msra.mxu0 0.0
    %401 = vmatprep.subr.mxu0 0.0
    %402 = vmatpush2.msra.mxu0 0.0
    %403 = vmatprep.subr.mxu0 0.0
    %404 = vmatpush2.msra.mxu0 0.0
    %405 = vmatprep.subr.mxu0 0.0
    %406 = vmatpush2.msra.mxu0 0.0
    %407 = vmatprep.mubr.f32.mxu0 0.0
    %408 = vmatmul.mubr.f32.gmra.mxu0 %v335
    %v409 = vpop.f32.mrf.mxu0
    %v410 = vadd.f32 0.0, %v409
    %v411 = vpop.f32.mrf.mxu0
    %412 = vmatprep.mubr.f32.mxu0 0.0
    %413 = vmatmul.mubr.f32.gmra.mxu0 %v340
    %v414 = vpop.f32.mrf.mxu0
    %v415 = vadd.f32 0.0, %v414
    %v416 = vpop.f32.mrf.mxu0
    %417 = vdwg.mxu0
    %418 = vst [vmem:[#allocation10] sm:$0xff] %v410
    %419 = vst [vmem:[#allocation10 + $0x8] sm:$0xff] %v415
    // Predicated region
    $region34: #{tpu_custom_call.1} parent=1 // pred_check
      _
    $region35: #{tpu_custom_call.1} parent=1 // pred_check_branch
      %421 = sbr.rel (0) target = $region37
    $region36: #{tpu_custom_call.1} parent=1 // pred_region
      %s423 = ssub.s32 256, 256
      %424 = vsyncadd [#allocation4], %s423
      %s425 = sshll.u32 [#allocation10], 4
      %s426 = int_to_ptr.vmem [resolvable:$true] %s425
      %431 = dma.vmem_to_hbm [thread:$0]  %s426, 256, %s4, [#allocation4], 128, 128, 8
    $region37: #{tpu_custom_call.1} parent=1 // pred_fallthru
      _
    // Predicated region
    $region38: #{tpu_custom_call.1} parent=1 // pred_check
      _
    $region39: #{tpu_custom_call.1} parent=1 // pred_check_branch
      %433 = sbr.rel (0) target = $region41
    $region40: #{tpu_custom_call.1} parent=1 // pred_region
      %434 = dma.done [#allocation4], 256
    $region41: #{tpu_custom_call.1} parent=1 // pred_fallthru
      _
    %435 = vsyncpa [#allocation3], 1
    %436 = vsyncpa [#allocation6], 1
    %437 = vsyncpa [#allocation9], 1
    %438 = vsyncpa [#allocation4], 1

</llo_original>
